<compile_context>
chip_gen: v7x
topology: tpu7x:2x2x1
jax: 0.10.0
libtpu: 0.0.40
codegen_flags: <defaults>
</compile_context>

<pallas_src>
import functools

import jax
import jax.numpy as jnp
from jax.experimental import pallas as pl
from jax.experimental.pallas import tpu as pltpu


def _fused_mlp_kernel(*refs, n_layers: int, activation):
    """refs = (x_ref, w0, b0, w1, b1, ..., w_{L-1}, b_{L-1}, o_ref).

    hid = x; for each layer: hid = hid @ W_t + b, activation applied between
    hidden layers only (matches EncoderMLP.forward). Dropout p=0.0 is identity.
    """
    x_ref = refs[0]
    o_ref = refs[-1]

    hid = x_ref[...].astype(jnp.float32)
    for i in range(n_layers):
        w = refs[1 + 2 * i][...]          # (d_in, d_out), pre-transposed
        b = refs[2 + 2 * i][...]          # (1, d_out)
        hid = jnp.dot(hid.astype(w.dtype), w,
                      preferred_element_type=jnp.float32)
        hid = hid + b.astype(jnp.float32)          # f32 epilogue
        if i < n_layers - 1 and activation is not None:
            if activation == "relu":
                hid = jnp.maximum(hid, 0.0)
            elif activation == "sigmoid":
                hid = jax.nn.sigmoid(hid)
            else:
                raise ValueError(f"unsupported activation: {activation}")
    o_ref[...] = hid.astype(o_ref.dtype)


def init_encoder_params(key, encoder_dims, dtype=jnp.float32):
    """nn.Linear-style params in PyTorch layout: W (out, in), b (out,)."""
    params = []
    for i in range(len(encoder_dims) - 1):
        fan_in, fan_out = encoder_dims[i], encoder_dims[i + 1]
        key, kw, kb = jax.random.split(key, 3)
        bound = 1.0 / jnp.sqrt(jnp.asarray(fan_in, dtype))
        w = jax.random.uniform(kw, (fan_out, fan_in), dtype, -bound, bound)
        b = jax.random.uniform(kb, (fan_out,), dtype, -bound, bound)
        params.append((w, b))
    return params


def prepare_params(params, dtype=None):
    """Pre-transpose once: W (out,in) -> (in,out); b -> (1,out).

    Pass dtype=jnp.bfloat16 on v6e/v7x to halve weight HBM traffic; the kernel
    still accumulates in f32 on the MXU.
    """
    prepared = []
    for w, b in params:
        w_t = jnp.transpose(w)
        b2 = b.reshape(1, -1)
        if dtype is not None:
            w_t = w_t.astype(dtype)
            b2 = b2.astype(dtype)
        prepared.append((w_t, b2))
    return prepared


def _vmem_limit_bytes(tm, dims, param_itemsize, act_itemsize):
    n_layers = len(dims) - 1
    w_bytes = sum(dims[i] * dims[i + 1] + dims[i + 1]
                  for i in range(n_layers)) * param_itemsize
    io_bytes = tm * (dims[0] + dims[-1]) * act_itemsize
    inter_bytes = 2 * tm * max(dims) * 4              # f32 intermediates
    est = 2 * (w_bytes + io_bytes) + inter_bytes + (2 << 20)  # 2x: double buffer
    return int(min(max(est, 8 << 20), 60 << 20))      # stay under v7x's 64 MiB


def encoder_mlp_forward(x, prepared_params,
                        encoder_non_linear_activation="relu",
                        tile_m=128):
    """Fused Pallas forward for EncoderMLP."""
    # TODO(synk): dropout p>0 (training-mode RNG masking) not implemented; p=0.0 here.
    assert tile_m % 8 == 0
    M, d0 = x.shape
    n_layers = len(prepared_params)
    dims = [d0] + [int(w_t.shape[1]) for (w_t, _) in prepared_params]
    d_out = dims[-1]

    # Batch tiling: TILE_M rows per grid step (whole batch if smaller); pad the
    # batch up to a tile multiple and slice the result back.
    tm = tile_m if M >= tile_m else M
    n_tiles = pl.cdiv(M, tm)
    m_pad = n_tiles * tm
    x_in = jnp.pad(x, ((0, m_pad - M), (0, 0))) if m_pad != M else x

    in_specs = [pl.BlockSpec((tm, d0), lambda i: (i, 0))]
    flat_inputs = [x_in]
    for w_t, b2 in prepared_params:
        k, n = w_t.shape
        in_specs.append(pl.BlockSpec((k, n), lambda i: (0, 0)))   # resident weights
        in_specs.append(pl.BlockSpec((1, n), lambda i: (0, 0)))   # resident bias
        flat_inputs += [w_t, b2]
    out_spec = pl.BlockSpec((tm, d_out), lambda i: (i, 0))

    flops = 2 * m_pad * sum(dims[i] * dims[i + 1] for i in range(n_layers))
    bytes_accessed = (x_in.size * x_in.dtype.itemsize
                      + sum(w.size * w.dtype.itemsize + b.size * b.dtype.itemsize
                            for (w, b) in prepared_params)
                      + m_pad * d_out * x.dtype.itemsize)

    kernel = functools.partial(_fused_mlp_kernel, n_layers=n_layers,
                               activation=encoder_non_linear_activation)

    out = pl.pallas_call(
        kernel,
        out_shape=jax.ShapeDtypeStruct((m_pad, d_out), x.dtype),
        grid=(n_tiles,),
        in_specs=in_specs,
        out_specs=out_spec,
        compiler_params=pltpu.CompilerParams(
            dimension_semantics=("parallel",),
            vmem_limit_bytes=_vmem_limit_bytes(
                tm, dims,
                prepared_params[0][0].dtype.itemsize,
                x.dtype.itemsize),
        ),
        cost_estimate=pl.CostEstimate(
            flops=flops, transcendentals=0, bytes_accessed=bytes_accessed),
    )(*flat_inputs)

    return out[:M] if m_pad != M else out


if __name__ == "__main__":
    # Small shapes consistent with the module (encoder_dims defaults scaled down).
    encoder_dims = [64, 128, 96, 16]
    batch = 200   # not a tile multiple: exercises the pad + slice-back path (2 tiles)

    key = jax.random.PRNGKey(0)
    key, kx = jax.random.split(key)
    x = jax.random.normal(kx, (batch, encoder_dims[0]), jnp.float32)

    params = init_encoder_params(key, encoder_dims)   # PyTorch layout (out, in)
    prepared = prepare_params(params)                 # transposed once, cached

    out = encoder_mlp_forward(x, prepared,
                              encoder_non_linear_activation="relu",
                              tile_m=128)
    out = jax.block_until_ready(out)

    # Cross-check against a plain-JAX reference of the same forward pass.
    ref = x
    for i, (w, b) in enumerate(params):
        ref = ref @ w.T + b
        if i < len(params) - 1:
            ref = jnp.maximum(ref, 0.0)

    assert out.shape == (batch, encoder_dims[-1])
    assert jnp.allclose(out, ref, atol=2e-5, rtol=2e-5), \
        float(jnp.max(jnp.abs(out - ref)))

    print("KERNEL_OK")
</pallas_src>

<mosaic_0001>
module attributes {stable_mosaic.version = 11 : i64} {
  func.func @_fused_mlp_kernel(%arg0: i32, %arg1: memref<128x64xf32, #tpu.memory_space<vmem>>, %arg2: memref<64x128xf32, #tpu.memory_space<vmem>>, %arg3: memref<1x128xf32, #tpu.memory_space<vmem>>, %arg4: memref<128x96xf32, #tpu.memory_space<vmem>>, %arg5: memref<1x96xf32, #tpu.memory_space<vmem>>, %arg6: memref<96x16xf32, #tpu.memory_space<vmem>>, %arg7: memref<1x16xf32, #tpu.memory_space<vmem>>, %arg8: memref<128x16xf32, #tpu.memory_space<vmem>>) attributes {dimension_semantics = [#tpu.dimension_semantics<parallel>], iteration_bounds = array<i64: 2>, scalar_prefetch = 0 : i64, scratch_operands = 0 : i64, tpu.core_type = #tpu.core_type<tc>, window_params = [{transform_indices = @transform_0, window_bounds = array<i64: 128, 64>}, {pipeline_mode = #tpu.pipeline_mode<synchronous>, transform_indices = @transform_1, window_bounds = array<i64: 64, 128>}, {pipeline_mode = #tpu.pipeline_mode<synchronous>, transform_indices = @transform_2, window_bounds = array<i64: 1, 128>}, {pipeline_mode = #tpu.pipeline_mode<synchronous>, transform_indices = @transform_3, window_bounds = array<i64: 128, 96>}, {pipeline_mode = #tpu.pipeline_mode<synchronous>, transform_indices = @transform_4, window_bounds = array<i64: 1, 96>}, {pipeline_mode = #tpu.pipeline_mode<synchronous>, transform_indices = @transform_5, window_bounds = array<i64: 96, 16>}, {pipeline_mode = #tpu.pipeline_mode<synchronous>, transform_indices = @transform_6, window_bounds = array<i64: 1, 16>}, {transform_indices = @transform_7, window_bounds = array<i64: 128, 16>}]} {
    %c0 = arith.constant 0 : index
    %c0_0 = arith.constant 0 : index
    %0 = vector.load %arg1[%c0, %c0_0] : memref<128x64xf32, #tpu.memory_space<vmem>>, vector<128x64xf32>
    %c0_1 = arith.constant 0 : index
    %c0_2 = arith.constant 0 : index
    %1 = vector.load %arg2[%c0_1, %c0_2] : memref<64x128xf32, #tpu.memory_space<vmem>>, vector<64x128xf32>
    %c0_3 = arith.constant 0 : index
    %c0_4 = arith.constant 0 : index
    %2 = vector.load %arg3[%c0_3, %c0_4] : memref<1x128xf32, #tpu.memory_space<vmem>>, vector<1x128xf32>
    %cst = arith.constant dense<0.000000e+00> : vector<128x128xf32>
    %3 = tpu.matmul %0, %1, %cst {dimension_numbers = #tpu.dot_dimension_numbers<[1], [0], [0], [1], [0, 0, 1, 1], [], []>} : vector<128x64xf32>, vector<64x128xf32>, vector<128x128xf32> -> vector<128x128xf32>
    %4 = vector.broadcast %2 : vector<1x128xf32> to vector<128x128xf32>
    %5 = arith.addf %3, %4 : vector<128x128xf32>
    %cst_5 = arith.constant 0.000000e+00 : f32
    %6 = vector.broadcast %cst_5 : f32 to vector<128x128xf32>
    %7 = arith.maximumf %5, %6 : vector<128x128xf32>
    %c0_6 = arith.constant 0 : index
    %c0_7 = arith.constant 0 : index
    %8 = vector.load %arg4[%c0_6, %c0_7] : memref<128x96xf32, #tpu.memory_space<vmem>>, vector<128x96xf32>
    %c0_8 = arith.constant 0 : index
    %c0_9 = arith.constant 0 : index
    %9 = vector.load %arg5[%c0_8, %c0_9] : memref<1x96xf32, #tpu.memory_space<vmem>>, vector<1x96xf32>
    %cst_10 = arith.constant dense<0.000000e+00> : vector<128x96xf32>
    %10 = tpu.matmul %7, %8, %cst_10 {dimension_numbers = #tpu.dot_dimension_numbers<[1], [0], [0], [1], [0, 0, 1, 1], [], []>} : vector<128x128xf32>, vector<128x96xf32>, vector<128x96xf32> -> vector<128x96xf32>
    %11 = vector.broadcast %9 : vector<1x96xf32> to vector<128x96xf32>
    %12 = arith.addf %10, %11 : vector<128x96xf32>
    %cst_11 = arith.constant 0.000000e+00 : f32
    %13 = vector.broadcast %cst_11 : f32 to vector<128x96xf32>
    %14 = arith.maximumf %12, %13 : vector<128x96xf32>
    %c0_12 = arith.constant 0 : index
    %c0_13 = arith.constant 0 : index
    %15 = vector.load %arg6[%c0_12, %c0_13] : memref<96x16xf32, #tpu.memory_space<vmem>>, vector<96x16xf32>
    %c0_14 = arith.constant 0 : index
    %c0_15 = arith.constant 0 : index
    %16 = vector.load %arg7[%c0_14, %c0_15] : memref<1x16xf32, #tpu.memory_space<vmem>>, vector<1x16xf32>
    %cst_16 = arith.constant dense<0.000000e+00> : vector<128x16xf32>
    %17 = tpu.matmul %14, %15, %cst_16 {dimension_numbers = #tpu.dot_dimension_numbers<[1], [0], [0], [1], [0, 0, 1, 1], [], []>} : vector<128x96xf32>, vector<96x16xf32>, vector<128x16xf32> -> vector<128x16xf32>
    %18 = vector.broadcast %16 : vector<1x16xf32> to vector<128x16xf32>
    %19 = arith.addf %17, %18 : vector<128x16xf32>
    %c0_17 = arith.constant 0 : index
    %c0_18 = arith.constant 0 : index
    %20 = vector.load %arg8[%c0_17, %c0_18] : memref<128x16xf32, #tpu.memory_space<vmem>>, vector<128x16xf32>
    tpu.vector_store %arg8[%c0_17, %c0_18], %19 {strides = array<i32>} : memref<128x16xf32, #tpu.memory_space<vmem>>, vector<128x16xf32>,
    return
  }
  func.func @transform_0(%arg0: i32) -> (i32, i32) {
    %c0_i32 = arith.constant 0 : i32
    %c0_i32_0 = arith.constant 0 : i32
    return %arg0, %c0_i32 : i32, i32
  }
  func.func @transform_1(%arg0: i32) -> (i32, i32) {
    %c0_i32 = arith.constant 0 : i32
    %c0_i32_0 = arith.constant 0 : i32
    %c0_i32_1 = arith.constant 0 : i32
    return %c0_i32, %c0_i32_0 : i32, i32
  }
  func.func @transform_2(%arg0: i32) -> (i32, i32) {
    %c0_i32 = arith.constant 0 : i32
    %c0_i32_0 = arith.constant 0 : i32
    %c0_i32_1 = arith.constant 0 : i32
    return %c0_i32, %c0_i32_0 : i32, i32
  }
  func.func @transform_3(%arg0: i32) -> (i32, i32) {
    %c0_i32 = arith.constant 0 : i32
    %c0_i32_0 = arith.constant 0 : i32
    %c0_i32_1 = arith.constant 0 : i32
    return %c0_i32, %c0_i32_0 : i32, i32
  }
  func.func @transform_4(%arg0: i32) -> (i32, i32) {
    %c0_i32 = arith.constant 0 : i32
    %c0_i32_0 = arith.constant 0 : i32
    %c0_i32_1 = arith.constant 0 : i32
    return %c0_i32, %c0_i32_0 : i32, i32
  }
  func.func @transform_5(%arg0: i32) -> (i32, i32) {
    %c0_i32 = arith.constant 0 : i32
    %c0_i32_0 = arith.constant 0 : i32
    %c0_i32_1 = arith.constant 0 : i32
    return %c0_i32, %c0_i32_0 : i32, i32
  }
  func.func @transform_6(%arg0: i32) -> (i32, i32) {
    %c0_i32 = arith.constant 0 : i32
    %c0_i32_0 = arith.constant 0 : i32
    %c0_i32_1 = arith.constant 0 : i32
    return %c0_i32, %c0_i32_0 : i32, i32
  }
  func.func @transform_7(%arg0: i32) -> (i32, i32) {
    %c0_i32 = arith.constant 0 : i32
    %c0_i32_0 = arith.constant 0 : i32
    return %arg0, %c0_i32 : i32, i32
  }
}

</mosaic_0001>

<llo_original>
// kernel: tpu_custom_call.1
$region0: #{tpu_custom_call.1}
  #allocation0 [shape = 'u32[]', space=smem, size = 0x4, offset = 0x4, fixed_abs, tag = 'smem constant byte address 0x4 - core index']
  #allocation1 [shape = 'u32[144,128]{1,0:T(1,128)}', space=vmem, size = 0x12000, scoped, tag = 'internal scratch']
  %s0 = inlined_call_operand.vmem [shape: f32[256,64], index: 0, kind: input, shape index: {}]
  %s1 = inlined_call_operand.vmem [shape: f32[64,128], index: 1, kind: input, shape index: {}]
  %s2 = inlined_call_operand.vmem [shape: f32[1,128], index: 2, kind: input, shape index: {}]
  %s3 = inlined_call_operand.vmem [shape: f32[128,96], index: 3, kind: input, shape index: {}]
  %s4 = inlined_call_operand.vmem [shape: f32[1,96], index: 4, kind: input, shape index: {}]
  %s5 = inlined_call_operand.vmem [shape: f32[96,16], index: 5, kind: input, shape index: {}]
  %s6 = inlined_call_operand.vmem [shape: f32[1,16], index: 6, kind: input, shape index: {}]
  %s7 = inlined_call_operand.vmem [shape: f32[256,16], index: 7, kind: output, shape index: {}]
  %s8 = sld [smem:[#allocation0]]
  $region61: #{tpu_custom_call.1} parent=0
    _
  %s10 = ssub.s32 1, %s8
  %s11 = scalar_select 0, %s10, %s8
  loop: start=0, step=1, limit=4
  $region2: #{tpu_custom_call.1} parent=0 // loop_pre_header
    _
  $region3: #{tpu_custom_call.1} parent=0 // loop_header
    %s13 = sphi 0, %s17
    %p14 = scmp.ge.s32.totalorder %s13, 4
    %s23 = sphi 0, %s25
    %s26 = sphi 0, %s23
    %s27 = sphi 0, %s26
    %s43 = sphi 0, %s27
    %s47 = sphi 0, %s47
    %s49 = sphi 0, %s47
    %s50 = sphi 0, %s49
    %s64 = sphi 0, %s50
    %s68 = sphi 0, %s68
    %s70 = sphi 0, %s68
    %s71 = sphi 0, %s70
    %s85 = sphi 0, %s71
    %s89 = sphi 0, %s89
    %s91 = sphi 0, %s89
    %s92 = sphi 0, %s91
    %s106 = sphi 0, %s92
    %s110 = sphi 0, %s110
    %s112 = sphi 0, %s110
    %s113 = sphi 0, %s112
    %s127 = sphi 0, %s113
    %s131 = sphi 0, %s131
    %s133 = sphi 0, %s131
    %s134 = sphi 0, %s133
    %s148 = sphi 0, %s134
    %s152 = sphi 0, %s152
    %s154 = sphi 0, %s152
    %s155 = sphi 0, %s154
    %s169 = sphi 0, %s155
    %s175 = sphi 0, %s177
    %s178 = sphi 0, %s175
    %s179 = sphi 0, %s178
    %s195 = sphi 0, %s179
  $region4: #{tpu_custom_call.1} parent=0 // loop_header_branch
    %16 = sbr.rel (%p14) target = $region8
  $region5: #{tpu_custom_call.1} parent=0 // loop_body
    %s18 = ssub.s32 %s13, 1
    %s19 = ssub.s32 %s13, 2
    %s20 = sadd.s32 %s13, 1
    %s21 = ssub.s32 %s13, %s20
    %p22 = scmp.eq.s32.totalorder %s21, 0
    %s24 = sadd.s32 %s23, 1
    %s25 = scalar_select %p22, %s23, %s24
    %p28 = pneg %p22
    %p29 = scmp.eq.s32.totalorder %s13, 1
    %p30 = por %p28, %p29
    %p31 = scmp.ne.s32.totalorder %s23, %s26
    %p32 = scmp.eq.s32.totalorder %s13, 0
    %p33 = por %p31, %p32
    %p34 = scmp.ne.s32.totalorder %s23, %s26
    %p35 = scmp.eq.s32.totalorder %s18, 1
    %p36 = por %p34, %p35
    %p37 = scmp.ne.s32.totalorder %s26, %s27
    %p38 = scmp.eq.s32.totalorder %s18, 0
    %p39 = por %p37, %p38
    %p40 = scmp.ne.s32.totalorder %s26, %s27
    %p41 = scmp.eq.s32.totalorder %s19, 1
    %p42 = por %p40, %p41
    %p44 = scmp.ne.s32.totalorder %s27, %s43
    %p45 = scmp.eq.s32.totalorder %s19, 0
    %p46 = por %p44, %p45
    %s48 = sadd.s32 %s47, 1
    %p51 = scmp.eq.s32.totalorder %s13, 1
    %p52 = scmp.ne.s32.totalorder %s47, %s49
    %p53 = scmp.eq.s32.totalorder %s13, 0
    %p54 = por %p52, %p53
    %p55 = scmp.ne.s32.totalorder %s47, %s49
    %p56 = scmp.eq.s32.totalorder %s18, 1
    %p57 = por %p55, %p56
    %p58 = scmp.ne.s32.totalorder %s49, %s50
    %p59 = scmp.eq.s32.totalorder %s18, 0
    %p60 = por %p58, %p59
    %p61 = scmp.ne.s32.totalorder %s49, %s50
    %p62 = scmp.eq.s32.totalorder %s19, 1
    %p63 = por %p61, %p62
    %p65 = scmp.ne.s32.totalorder %s50, %s64
    %p66 = scmp.eq.s32.totalorder %s19, 0
    %p67 = por %p65, %p66
    %s69 = sadd.s32 %s68, 1
    %p72 = scmp.eq.s32.totalorder %s13, 1
    %p73 = scmp.ne.s32.totalorder %s68, %s70
    %p74 = scmp.eq.s32.totalorder %s13, 0
    %p75 = por %p73, %p74
    %p76 = scmp.ne.s32.totalorder %s68, %s70
    %p77 = scmp.eq.s32.totalorder %s18, 1
    %p78 = por %p76, %p77
    %p79 = scmp.ne.s32.totalorder %s70, %s71
    %p80 = scmp.eq.s32.totalorder %s18, 0
    %p81 = por %p79, %p80
    %p82 = scmp.ne.s32.totalorder %s70, %s71
    %p83 = scmp.eq.s32.totalorder %s19, 1
    %p84 = por %p82, %p83
    %p86 = scmp.ne.s32.totalorder %s71, %s85
    %p87 = scmp.eq.s32.totalorder %s19, 0
    %p88 = por %p86, %p87
    %s90 = sadd.s32 %s89, 1
    %p93 = scmp.eq.s32.totalorder %s13, 1
    %p94 = scmp.ne.s32.totalorder %s89, %s91
    %p95 = scmp.eq.s32.totalorder %s13, 0
    %p96 = por %p94, %p95
    %p97 = scmp.ne.s32.totalorder %s89, %s91
    %p98 = scmp.eq.s32.totalorder %s18, 1
    %p99 = por %p97, %p98
    %p100 = scmp.ne.s32.totalorder %s91, %s92
    %p101 = scmp.eq.s32.totalorder %s18, 0
    %p102 = por %p100, %p101
    %p103 = scmp.ne.s32.totalorder %s91, %s92
    %p104 = scmp.eq.s32.totalorder %s19, 1
    %p105 = por %p103, %p104
    %p107 = scmp.ne.s32.totalorder %s92, %s106
    %p108 = scmp.eq.s32.totalorder %s19, 0
    %p109 = por %p107, %p108
    %s111 = sadd.s32 %s110, 1
    %p114 = scmp.eq.s32.totalorder %s13, 1
    %p115 = scmp.ne.s32.totalorder %s110, %s112
    %p116 = scmp.eq.s32.totalorder %s13, 0
    %p117 = por %p115, %p116
    %p118 = scmp.ne.s32.totalorder %s110, %s112
    %p119 = scmp.eq.s32.totalorder %s18, 1
    %p120 = por %p118, %p119
    %p121 = scmp.ne.s32.totalorder %s112, %s113
    %p122 = scmp.eq.s32.totalorder %s18, 0
    %p123 = por %p121, %p122
    %p124 = scmp.ne.s32.totalorder %s112, %s113
    %p125 = scmp.eq.s32.totalorder %s19, 1
    %p126 = por %p124, %p125
    %p128 = scmp.ne.s32.totalorder %s113, %s127
    %p129 = scmp.eq.s32.totalorder %s19, 0
    %p130 = por %p128, %p129
    %s132 = sadd.s32 %s131, 1
    %p135 = scmp.eq.s32.totalorder %s13, 1
    %p136 = scmp.ne.s32.totalorder %s131, %s133
    %p137 = scmp.eq.s32.totalorder %s13, 0
    %p138 = por %p136, %p137
    %p139 = scmp.ne.s32.totalorder %s131, %s133
    %p140 = scmp.eq.s32.totalorder %s18, 1
    %p141 = por %p139, %p140
    %p142 = scmp.ne.s32.totalorder %s133, %s134
    %p143 = scmp.eq.s32.totalorder %s18, 0
    %p144 = por %p142, %p143
    %p145 = scmp.ne.s32.totalorder %s133, %s134
    %p146 = scmp.eq.s32.totalorder %s19, 1
    %p147 = por %p145, %p146
    %p149 = scmp.ne.s32.totalorder %s134, %s148
    %p150 = scmp.eq.s32.totalorder %s19, 0
    %p151 = por %p149, %p150
    %s153 = sadd.s32 %s152, 1
    %p156 = scmp.eq.s32.totalorder %s13, 1
    %p157 = scmp.ne.s32.totalorder %s152, %s154
    %p158 = scmp.eq.s32.totalorder %s13, 0
    %p159 = por %p157, %p158
    %p160 = scmp.ne.s32.totalorder %s152, %s154
    %p161 = scmp.eq.s32.totalorder %s18, 1
    %p162 = por %p160, %p161
    %p163 = scmp.ne.s32.totalorder %s154, %s155
    %p164 = scmp.eq.s32.totalorder %s18, 0
    %p165 = por %p163, %p164
    %p166 = scmp.ne.s32.totalorder %s154, %s155
    %p167 = scmp.eq.s32.totalorder %s19, 1
    %p168 = por %p166, %p167
    %p170 = scmp.ne.s32.totalorder %s155, %s169
    %p171 = scmp.eq.s32.totalorder %s19, 0
    %p172 = por %p170, %p171
    %s173 = ssub.s32 %s13, %s20
    %p174 = scmp.eq.s32.totalorder %s173, 0
    %s176 = sadd.s32 %s175, 1
    %s177 = scalar_select %p174, %s175, %s176
    %p180 = pneg %p174
    %p181 = scmp.eq.s32.totalorder %s13, 1
    %p182 = por %p180, %p181
    %p183 = scmp.ne.s32.totalorder %s175, %s178
    %p184 = scmp.eq.s32.totalorder %s13, 0
    %p185 = por %p183, %p184
    %p186 = scmp.ne.s32.totalorder %s175, %s178
    %p187 = scmp.eq.s32.totalorder %s18, 1
    %p188 = por %p186, %p187
    %p189 = scmp.ne.s32.totalorder %s178, %s179
    %p190 = scmp.eq.s32.totalorder %s18, 0
    %p191 = por %p189, %p190
    %p192 = scmp.ne.s32.totalorder %s178, %s179
    %p193 = scmp.eq.s32.totalorder %s19, 1
    %p194 = por %p192, %p193
    %p196 = scmp.ne.s32.totalorder %s179, %s195
    %p197 = scmp.eq.s32.totalorder %s19, 0
    %p198 = por %p196, %p197
    %p199 = scmp.le.s32.totalorder 1, %s13
    %p200 = scmp.lt.s32.totalorder %s13, 3
    %p201 = pnand %p199, %p200
    %p202 = pneg %p201
    // Predicated region
    $region9: #{tpu_custom_call.1} parent=5 // pred_check
      _
    $region10: #{tpu_custom_call.1} parent=5 // pred_check_branch
      %204 = sbr.rel (%p201) target = $region12
    $region11: #{tpu_custom_call.1} parent=5 // pred_region
      %s205 = ssub.s32 %s13, 1
      // Predicated region
      $region13: #{tpu_custom_call.1} parent=11 // pred_check
        %p206 = pneg %p60
      $region14: #{tpu_custom_call.1} parent=11 // pred_check_branch
        %208 = sbr.rel (%p206) target = $region16
      $region15: #{tpu_custom_call.1} parent=11 // pred_region
        _
      $region16: #{tpu_custom_call.1} parent=11 // pred_fallthru
        _
      // Predicated region
      $region17: #{tpu_custom_call.1} parent=11 // pred_check
        %p209 = pneg %p81
      $region18: #{tpu_custom_call.1} parent=11 // pred_check_branch
        %211 = sbr.rel (%p209) target = $region20
      $region19: #{tpu_custom_call.1} parent=11 // pred_region
        _
      $region20: #{tpu_custom_call.1} parent=11 // pred_fallthru
        _
      // Predicated region
      $region21: #{tpu_custom_call.1} parent=11 // pred_check
        %p212 = pneg %p102
      $region22: #{tpu_custom_call.1} parent=11 // pred_check_branch
        %214 = sbr.rel (%p212) target = $region24
      $region23: #{tpu_custom_call.1} parent=11 // pred_region
        _
      $region24: #{tpu_custom_call.1} parent=11 // pred_fallthru
        _
      // Predicated region
      $region25: #{tpu_custom_call.1} parent=11 // pred_check
        %p215 = pneg %p123
      $region26: #{tpu_custom_call.1} parent=11 // pred_check_branch
        %217 = sbr.rel (%p215) target = $region28
      $region27: #{tpu_custom_call.1} parent=11 // pred_region
        _
      $region28: #{tpu_custom_call.1} parent=11 // pred_fallthru
        _
      // Predicated region
      $region29: #{tpu_custom_call.1} parent=11 // pred_check
        %p218 = pneg %p144
      $region30: #{tpu_custom_call.1} parent=11 // pred_check_branch
        %220 = sbr.rel (%p218) target = $region32
      $region31: #{tpu_custom_call.1} parent=11 // pred_region
        _
      $region32: #{tpu_custom_call.1} parent=11 // pred_fallthru
        _
      // Predicated region
      $region33: #{tpu_custom_call.1} parent=11 // pred_check
        %p221 = pneg %p165
      $region34: #{tpu_custom_call.1} parent=11 // pred_check_branch
        %223 = sbr.rel (%p221) target = $region36
      $region35: #{tpu_custom_call.1} parent=11 // pred_region
        _
      $region36: #{tpu_custom_call.1} parent=11 // pred_fallthru
        _
    $region12: #{tpu_custom_call.1} parent=5 // pred_fallthru
      _
    %p224 = scmp.lt.s32.totalorder %s13, 2
    // Predicated region
    $region37: #{tpu_custom_call.1} parent=5 // pred_check
      %p225 = pneg %p224
    $region38: #{tpu_custom_call.1} parent=5 // pred_check_branch
      %227 = sbr.rel (%p225) target = $region40
    $region39: #{tpu_custom_call.1} parent=5 // pred_region
      // Predicated region
      $region41: #{tpu_custom_call.1} parent=39 // pred_check
        %p228 = pneg %p33
      $region42: #{tpu_custom_call.1} parent=39 // pred_check_branch
        %230 = sbr.rel (%p228) target = $region44
      $region43: #{tpu_custom_call.1} parent=39 // pred_region
        %s231 = smul.u32 16, %s13
        %p232 = scmp.lt.s32.totalorder %s231, 31
        %s233 = scalar_select %p232, %s231, 31
        %s234 = smul.addr %s233, 8
        %s235 = scalar_lea.vmem %s0, %s234
        %s236 = smul.u32 16, %s13
      $region44: #{tpu_custom_call.1} parent=39 // pred_fallthru
        _
    $region40: #{tpu_custom_call.1} parent=5 // pred_fallthru
      _
    %p237 = scmp.le.s32.totalorder 1, %s13
    %p238 = scmp.lt.s32.totalorder %s13, 3
    %p239 = pnand %p237, %p238
    %p240 = pneg %p239
    // Predicated region
    $region45: #{tpu_custom_call.1} parent=5 // pred_check
      _
    $region46: #{tpu_custom_call.1} parent=5 // pred_check_branch
      %242 = sbr.rel (%p239) target = $region48
    $region47: #{tpu_custom_call.1} parent=5 // pred_region
      %s243 = ssub.s32 %s13, 1
      %s244 = smul.u32 16, %s18
      %p245 = scmp.lt.s32.totalorder %s244, 31
      %s246 = scalar_select %p245, %s244, 31
      %s247 = smul.addr %s246, 8
      %s248 = scalar_lea.vmem %s0, %s247
      %p249 = pneg %p39
      %p250 = pneg %p36
      %p251 = pneg %p60
      %p252 = pneg %p57
      %p253 = pneg %p81
      %p254 = pneg %p78
      %p255 = pneg %p102
      %p256 = pneg %p99
      %p257 = pneg %p123
      %p258 = pneg %p120
      %p259 = pneg %p144
      %p260 = pneg %p141
      %p261 = pneg %p165
      %p262 = pneg %p162
      %p263 = pneg %p191
      %p264 = pneg %p188
      %s265 = smul.u32 16, %s18
      %p266 = scmp.lt.s32.totalorder %s265, 31
      %s267 = scalar_select %p266, %s265, 31
      %s268 = smul.addr %s267, 8
      %s269 = scalar_lea.vmem %s7, %s268
      %s270 = smul.u32 16, %s18
      %p271 = scmp.lt.s32.totalorder %s270, 31
      %s272 = scalar_select %p271, %s270, 31
      %s273 = smul.addr %s272, 8
      %s274 = scalar_lea.vmem %s0, %s273
      %s275 = smul.u32 16, %s18
      %s276 = smul.u32 16, %s18
      %p277 = scmp.lt.s32.totalorder %s276, 31
      %s278 = scalar_select %p277, %s276, 31
      %s279 = smul.addr %s278, 8
      %s280 = scalar_lea.vmem %s7, %s279
      %s281 = smul.u32 16, %s18
      %v282 = vld [vmem:[%s274] sm:$0xff]
      %v283 = vld [vmem:[%s274 + $0x8] sm:$0xff]
      %v284 = vld [vmem:[%s274 + $0x10] sm:$0xff]
      %v285 = vld [vmem:[%s274 + $0x18] sm:$0xff]
      %v286 = vld [vmem:[%s274 + $0x20] sm:$0xff]
      %v287 = vld [vmem:[%s274 + $0x28] sm:$0xff]
      %v288 = vld [vmem:[%s274 + $0x30] sm:$0xff]
      %v289 = vld [vmem:[%s274 + $0x38] sm:$0xff]
      %v290 = vld [vmem:[%s274 + $0x40] sm:$0xff]
      %v291 = vld [vmem:[%s274 + $0x48] sm:$0xff]
      %v292 = vld [vmem:[%s274 + $0x50] sm:$0xff]
      %v293 = vld [vmem:[%s274 + $0x58] sm:$0xff]
      %v294 = vld [vmem:[%s274 + $0x60] sm:$0xff]
      %v295 = vld [vmem:[%s274 + $0x68] sm:$0xff]
      %v296 = vld [vmem:[%s274 + $0x70] sm:$0xff]
      %v297 = vld [vmem:[%s274 + $0x78] sm:$0xff]
      %v298 = vld [vmem:[%s1] sm:$0xff]
      %v299 = vld [vmem:[%s1 + $0x8] sm:$0xff]
      %v300 = vld [vmem:[%s1 + $0x10] sm:$0xff]
      %v301 = vld [vmem:[%s1 + $0x18] sm:$0xff]
      %v302 = vld [vmem:[%s1 + $0x20] sm:$0xff]
      %v303 = vld [vmem:[%s1 + $0x28] sm:$0xff]
      %v304 = vld [vmem:[%s1 + $0x30] sm:$0xff]
      %v305 = vld [vmem:[%s1 + $0x38] sm:$0xff]
      %v306 = vld [vmem:[%s2] sm:$0x1]
      %v308 = vlaneseq
      %v309 = vshrl.u32 %v308, 7
      %v310 = vsub.s32 0, %v309
      %v311 = vrot.slane %v306, %v310
      %vm313 = vcmask 523264
      %v315 = vsel %vm313, %v282, 0
      %v318 = vsel %vm313, %v283, 0
      %v321 = vsel %vm313, %v284, 0
      %v324 = vsel %vm313, %v285, 0
      %v327 = vsel %vm313, %v286, 0
      %v330 = vsel %vm313, %v287, 0
      %v333 = vsel %vm313, %v288, 0
      %v336 = vsel %vm313, %v289, 0
      %v339 = vsel %vm313, %v290, 0
      %v342 = vsel %vm313, %v291, 0
      %v345 = vsel %vm313, %v292, 0
      %v348 = vsel %vm313, %v293, 0
      %v351 = vsel %vm313, %v294, 0
      %v354 = vsel %vm313, %v295, 0
      %v357 = vsel %vm313, %v296, 0
      %v360 = vsel %vm313, %v297, 0
      %362 = vmatprep.subr.mxu0 0.0
      %363 = vmatpush1.msra.mxu0 %v298
      %364 = vmatprep.subr.mxu0 0.0
      %365 = vmatpush1.msra.mxu0 %v299
      %366 = vmatprep.subr.mxu0 0.0
      %367 = vmatpush1.msra.mxu0 %v300
      %368 = vmatprep.subr.mxu0 0.0
      %369 = vmatpush1.msra.mxu0 %v301
      %370 = vmatprep.subr.mxu0 0.0
      %371 = vmatpush1.msra.mxu0 %v302
      %372 = vmatprep.subr.mxu0 0.0
      %373 = vmatpush1.msra.mxu0 %v303
      %374 = vmatprep.subr.mxu0 0.0
      %375 = vmatpush1.msra.mxu0 %v304
      %376 = vmatprep.subr.mxu0 0.0
      %377 = vmatpush1.msra.mxu0 %v305
      %378 = vmatprep.subr.mxu0 0.0
      %379 = vmatpush1.msra.mxu0 0.0
      %380 = vmatprep.subr.mxu0 0.0
      %381 = vmatpush1.msra.mxu0 0.0
      %382 = vmatprep.subr.mxu0 0.0
      %383 = vmatpush1.msra.mxu0 0.0
      %384 = vmatprep.subr.mxu0 0.0
      %385 = vmatpush1.msra.mxu0 0.0
      %386 = vmatprep.subr.mxu0 0.0
      %387 = vmatpush1.msra.mxu0 0.0
      %388 = vmatprep.subr.mxu0 0.0
      %389 = vmatpush1.msra.mxu0 0.0
      %390 = vmatprep.subr.mxu0 0.0
      %391 = vmatpush1.msra.mxu0 0.0
      %392 = vmatprep.subr.mxu0 0.0
      %393 = vmatpush1.msra.mxu0 0.0
      %394 = vmatprep.subr.mxu0 0.0
      %395 = vmatpush1.msra.mxu0 0.0
      %396 = vmatprep.subr.mxu0 0.0
      %397 = vmatpush1.msra.mxu0 0.0
      %398 = vmatprep.subr.mxu0 0.0
      %399 = vmatpush1.msra.mxu0 0.0
      %400 = vmatprep.subr.mxu0 0.0
      %401 = vmatpush1.msra.mxu0 0.0
      %402 = vmatprep.subr.mxu0 0.0
      %403 = vmatpush1.msra.mxu0 0.0
      %404 = vmatprep.subr.mxu0 0.0
      %405 = vmatpush1.msra.mxu0 0.0
      %406 = vmatprep.subr.mxu0 0.0
      %407 = vmatpush1.msra.mxu0 0.0
      %408 = vmatprep.subr.mxu0 0.0
      %409 = vmatpush1.msra.mxu0 0.0
      %410 = vmatprep.subr.mxu0 0.0
      %411 = vmatpush1.msra.mxu0 0.0
      %412 = vmatprep.subr.mxu0 0.0
      %413 = vmatpush1.msra.mxu0 0.0
      %414 = vmatprep.subr.mxu0 0.0
      %415 = vmatpush1.msra.mxu0 0.0
      %416 = vmatprep.subr.mxu0 0.0
      %417 = vmatpush1.msra.mxu0 0.0
      %418 = vmatprep.subr.mxu0 0.0
      %419 = vmatpush1.msra.mxu0 0.0
      %420 = vmatprep.subr.mxu0 0.0
      %421 = vmatpush1.msra.mxu0 0.0
      %422 = vmatprep.subr.mxu0 0.0
      %423 = vmatpush1.msra.mxu0 0.0
      %424 = vmatprep.subr.mxu0 0.0
      %425 = vmatpush1.msra.mxu0 0.0
      %426 = vmatprep.mubr.f32.mxu0 0.0
      %427 = vmatmul.mubr.f32.gmra.mrb[0].mxu0 %v315
      %v428 = vpop.f32.mrb[0].mxu0
      %v429 = vadd.f32 %v311, %v428
      %v430 = vpop.f32.mrb[0].mxu0
      %431 = vmatprep.mubr.f32.mxu0 0.0
      %432 = vmatmul.mubr.f32.gmra.mrb[0].mxu0 %v318
      %v433 = vpop.f32.mrb[0].mxu0
      %v434 = vadd.f32 %v311, %v433
      %v435 = vpop.f32.mrb[0].mxu0
      %436 = vmatprep.mubr.f32.mxu0 0.0
      %437 = vmatmul.mubr.f32.gmra.mrb[0].mxu0 %v321
      %v438 = vpop.f32.mrb[0].mxu0
      %v439 = vadd.f32 %v311, %v438
      %v440 = vpop.f32.mrb[0].mxu0
      %441 = vmatprep.mubr.f32.mxu0 0.0
      %442 = vmatmul.mubr.f32.gmra.mrb[0].mxu0 %v324
      %v443 = vpop.f32.mrb[0].mxu0
      %v444 = vadd.f32 %v311, %v443
      %v445 = vpop.f32.mrb[0].mxu0
      %446 = vmatprep.mubr.f32.mxu0 0.0
      %447 = vmatmul.mubr.f32.gmra.mrb[0].mxu0 %v327
      %v448 = vpop.f32.mrb[0].mxu0
      %v449 = vadd.f32 %v311, %v448
      %v450 = vpop.f32.mrb[0].mxu0
      %451 = vmatprep.mubr.f32.mxu0 0.0
      %452 = vmatmul.mubr.f32.gmra.mrb[0].mxu0 %v330
      %v453 = vpop.f32.mrb[0].mxu0
      %v454 = vadd.f32 %v311, %v453
      %v455 = vpop.f32.mrb[0].mxu0
      %456 = vmatprep.mubr.f32.mxu0 0.0
      %457 = vmatmul.mubr.f32.gmra.mrb[0].mxu0 %v333
      %v458 = vpop.f32.mrb[0].mxu0
      %v459 = vadd.f32 %v311, %v458
      %v460 = vpop.f32.mrb[0].mxu0
      %461 = vmatprep.mubr.f32.mxu0 0.0
      %462 = vmatmul.mubr.f32.gmra.mrb[0].mxu0 %v336
      %v463 = vpop.f32.mrb[0].mxu0
      %v464 = vadd.f32 %v311, %v463
      %v465 = vpop.f32.mrb[0].mxu0
      %466 = vmatprep.mubr.f32.mxu0 0.0
      %467 = vmatmul.mubr.f32.gmra.mrb[0].mxu0 %v339
      %v468 = vpop.f32.mrb[0].mxu0
      %v469 = vadd.f32 %v311, %v468
      %v470 = vpop.f32.mrb[0].mxu0
      %471 = vmatprep.mubr.f32.mxu0 0.0
      %472 = vmatmul.mubr.f32.gmra.mrb[0].mxu0 %v342
      %v473 = vpop.f32.mrb[0].mxu0
      %v474 = vadd.f32 %v311, %v473
      %v475 = vpop.f32.mrb[0].mxu0
      %476 = vmatprep.mubr.f32.mxu0 0.0
      %477 = vmatmul.mubr.f32.gmra.mrb[0].mxu0 %v345
      %v478 = vpop.f32.mrb[0].mxu0
      %v479 = vadd.f32 %v311, %v478
      %v480 = vpop.f32.mrb[0].mxu0
      %481 = vmatprep.mubr.f32.mxu0 0.0
      %482 = vmatmul.mubr.f32.gmra.mrb[0].mxu0 %v348
      %v483 = vpop.f32.mrb[0].mxu0
      %v484 = vadd.f32 %v311, %v483
      %v485 = vpop.f32.mrb[0].mxu0
      %486 = vmatprep.mubr.f32.mxu0 0.0
      %487 = vmatmul.mubr.f32.gmra.mrb[0].mxu0 %v351
      %v488 = vpop.f32.mrb[0].mxu0
      %v489 = vadd.f32 %v311, %v488
      %v490 = vpop.f32.mrb[0].mxu0
      %491 = vmatprep.mubr.f32.mxu0 0.0
      %492 = vmatmul.mubr.f32.gmra.mrb[0].mxu0 %v354
      %v493 = vpop.f32.mrb[0].mxu0
      %v494 = vadd.f32 %v311, %v493
      %v495 = vpop.f32.mrb[0].mxu0
      %496 = vmatprep.mubr.f32.mxu0 0.0
      %497 = vmatmul.mubr.f32.gmra.mrb[0].mxu0 %v357
      %v498 = vpop.f32.mrb[0].mxu0
      %v499 = vadd.f32 %v311, %v498
      %v500 = vpop.f32.mrb[0].mxu0
      %501 = vmatprep.mubr.f32.mxu0 0.0
      %502 = vmatmul.mubr.f32.gmra.mrb[0].mxu0 %v360
      %v503 = vpop.f32.mrb[0].mxu0
      %v504 = vadd.f32 %v311, %v503
      %v505 = vpop.f32.mrb[0].mxu0
      %506 = vdwg.mxu0
      %v507 = vmax.f32 %v429, 0.0
      %v508 = vmax.f32 %v434, 0.0
      %v509 = vmax.f32 %v439, 0.0
      %v510 = vmax.f32 %v444, 0.0
      %v511 = vmax.f32 %v449, 0.0
      %v512 = vmax.f32 %v454, 0.0
      %v513 = vmax.f32 %v459, 0.0
      %v514 = vmax.f32 %v464, 0.0
      %v515 = vmax.f32 %v469, 0.0
      %v516 = vmax.f32 %v474, 0.0
      %v517 = vmax.f32 %v479, 0.0
      %v518 = vmax.f32 %v484, 0.0
      %v519 = vmax.f32 %v489, 0.0
      %v520 = vmax.f32 %v494, 0.0
      %v521 = vmax.f32 %v499, 0.0
      %v522 = vmax.f32 %v504, 0.0
      %v523 = vld [vmem:[%s3] sm:$0xff]
      %v524 = vld [vmem:[%s3 + $0x8] sm:$0xff]
      %v525 = vld [vmem:[%s3 + $0x10] sm:$0xff]
      %v526 = vld [vmem:[%s3 + $0x18] sm:$0xff]
      %v527 = vld [vmem:[%s3 + $0x20] sm:$0xff]
      %v528 = vld [vmem:[%s3 + $0x28] sm:$0xff]
      %v529 = vld [vmem:[%s3 + $0x30] sm:$0xff]
      %v530 = vld [vmem:[%s3 + $0x38] sm:$0xff]
      %v531 = vld [vmem:[%s3 + $0x40] sm:$0xff]
      %v532 = vld [vmem:[%s3 + $0x48] sm:$0xff]
      %v533 = vld [vmem:[%s3 + $0x50] sm:$0xff]
      %v534 = vld [vmem:[%s3 + $0x58] sm:$0xff]
      %v535 = vld [vmem:[%s3 + $0x60] sm:$0xff]
      %v536 = vld [vmem:[%s3 + $0x68] sm:$0xff]
      %v537 = vld [vmem:[%s3 + $0x70] sm:$0xff]
      %v538 = vld [vmem:[%s3 + $0x78] sm:$0xff]
      %v539 = vld [vmem:[%s4] sm:$0x1]
      %v541 = vlaneseq
      %v542 = vshrl.u32 %v541, 7
      %v543 = vsub.s32 0, %v542
      %v544 = vrot.slane %v539, %v543
      %546 = vmatprep.subr.mxu0 0.0
      %547 = vmatpush1.msra.mxu0 %v523
      %548 = vmatprep.subr.mxu0 0.0
      %549 = vmatpush1.msra.mxu0 %v524
      %550 = vmatprep.subr.mxu0 0.0
      %551 = vmatpush1.msra.mxu0 %v525
      %552 = vmatprep.subr.mxu0 0.0
      %553 = vmatpush1.msra.mxu0 %v526
      %554 = vmatprep.subr.mxu0 0.0
      %555 = vmatpush1.msra.mxu0 %v527
      %556 = vmatprep.subr.mxu0 0.0
      %557 = vmatpush1.msra.mxu0 %v528
      %558 = vmatprep.subr.mxu0 0.0
      %559 = vmatpush1.msra.mxu0 %v529
      %560 = vmatprep.subr.mxu0 0.0
      %561 = vmatpush1.msra.mxu0 %v530
      %562 = vmatprep.subr.mxu0 0.0
      %563 = vmatpush1.msra.mxu0 %v531
      %564 = vmatprep.subr.mxu0 0.0
      %565 = vmatpush1.msra.mxu0 %v532
      %566 = vmatprep.subr.mxu0 0.0
      %567 = vmatpush1.msra.mxu0 %v533
      %568 = vmatprep.subr.mxu0 0.0
      %569 = vmatpush1.msra.mxu0 %v534
      %570 = vmatprep.subr.mxu0 0.0
      %571 = vmatpush1.msra.mxu0 %v535
      %572 = vmatprep.subr.mxu0 0.0
      %573 = vmatpush1.msra.mxu0 %v536
      %574 = vmatprep.subr.mxu0 0.0
      %575 = vmatpush1.msra.mxu0 %v537
      %576 = vmatprep.subr.mxu0 0.0
      %577 = vmatpush1.msra.mxu0 %v538
      %578 = vmatprep.subr.mxu0 0.0
      %579 = vmatpush1.msra.mxu0 0.0
      %580 = vmatprep.subr.mxu0 0.0
      %581 = vmatpush1.msra.mxu0 0.0
      %582 = vmatprep.subr.mxu0 0.0
      %583 = vmatpush1.msra.mxu0 0.0
      %584 = vmatprep.subr.mxu0 0.0
      %585 = vmatpush1.msra.mxu0 0.0
      %586 = vmatprep.subr.mxu0 0.0
      %587 = vmatpush1.msra.mxu0 0.0
      %588 = vmatprep.subr.mxu0 0.0
      %589 = vmatpush1.msra.mxu0 0.0
      %590 = vmatprep.subr.mxu0 0.0
      %591 = vmatpush1.msra.mxu0 0.0
      %592 = vmatprep.subr.mxu0 0.0
      %593 = vmatpush1.msra.mxu0 0.0
      %594 = vmatprep.subr.mxu0 0.0
      %595 = vmatpush1.msra.mxu0 0.0
      %596 = vmatprep.subr.mxu0 0.0
      %597 = vmatpush1.msra.mxu0 0.0
      %598 = vmatprep.subr.mxu0 0.0
      %599 = vmatpush1.msra.mxu0 0.0
      %600 = vmatprep.subr.mxu0 0.0
      %601 = vmatpush1.msra.mxu0 0.0
      %602 = vmatprep.subr.mxu0 0.0
      %603 = vmatpush1.msra.mxu0 0.0
      %604 = vmatprep.subr.mxu0 0.0
      %605 = vmatpush1.msra.mxu0 0.0
      %606 = vmatprep.subr.mxu0 0.0
      %607 = vmatpush1.msra.mxu0 0.0
      %608 = vmatprep.subr.mxu0 0.0
      %609 = vmatpush1.msra.mxu0 0.0
      %610 = vmatprep.mubr.f32.mxu0 0.0
      %611 = vmatmul.mubr.f32.gmra.mrb[0].mxu0 %v507
      %v612 = vpop.f32.mrb[0].mxu0
      %v613 = vadd.f32 %v544, %v612
      %v614 = vpop.f32.mrb[0].mxu0
      %615 = vmatprep.mubr.f32.mxu0 0.0
      %616 = vmatmul.mubr.f32.gmra.mrb[0].mxu0 %v508
      %v617 = vpop.f32.mrb[0].mxu0
      %v618 = vadd.f32 %v544, %v617
      %v619 = vpop.f32.mrb[0].mxu0
      %620 = vmatprep.mubr.f32.mxu0 0.0
      %621 = vmatmul.mubr.f32.gmra.mrb[0].mxu0 %v509
      %v622 = vpop.f32.mrb[0].mxu0
      %v623 = vadd.f32 %v544, %v622
      %v624 = vpop.f32.mrb[0].mxu0
      %625 = vmatprep.mubr.f32.mxu0 0.0
      %626 = vmatmul.mubr.f32.gmra.mrb[0].mxu0 %v510
      %v627 = vpop.f32.mrb[0].mxu0
      %v628 = vadd.f32 %v544, %v627
      %v629 = vpop.f32.mrb[0].mxu0
      %630 = vmatprep.mubr.f32.mxu0 0.0
      %631 = vmatmul.mubr.f32.gmra.mrb[0].mxu0 %v511
      %v632 = vpop.f32.mrb[0].mxu0
      %v633 = vadd.f32 %v544, %v632
      %v634 = vpop.f32.mrb[0].mxu0
      %635 = vmatprep.mubr.f32.mxu0 0.0
      %636 = vmatmul.mubr.f32.gmra.mrb[0].mxu0 %v512
      %v637 = vpop.f32.mrb[0].mxu0
      %v638 = vadd.f32 %v544, %v637
      %v639 = vpop.f32.mrb[0].mxu0
      %640 = vmatprep.mubr.f32.mxu0 0.0
      %641 = vmatmul.mubr.f32.gmra.mrb[0].mxu0 %v513
      %v642 = vpop.f32.mrb[0].mxu0
      %v643 = vadd.f32 %v544, %v642
      %v644 = vpop.f32.mrb[0].mxu0
      %645 = vmatprep.mubr.f32.mxu0 0.0
      %646 = vmatmul.mubr.f32.gmra.mrb[0].mxu0 %v514
      %v647 = vpop.f32.mrb[0].mxu0
      %v648 = vadd.f32 %v544, %v647
      %v649 = vpop.f32.mrb[0].mxu0
      %650 = vmatprep.mubr.f32.mxu0 0.0
      %651 = vmatmul.mubr.f32.gmra.mrb[0].mxu0 %v515
      %v652 = vpop.f32.mrb[0].mxu0
      %v653 = vadd.f32 %v544, %v652
      %v654 = vpop.f32.mrb[0].mxu0
      %655 = vmatprep.mubr.f32.mxu0 0.0
      %656 = vmatmul.mubr.f32.gmra.mrb[0].mxu0 %v516
      %v657 = vpop.f32.mrb[0].mxu0
      %v658 = vadd.f32 %v544, %v657
      %v659 = vpop.f32.mrb[0].mxu0
      %660 = vmatprep.mubr.f32.mxu0 0.0
      %661 = vmatmul.mubr.f32.gmra.mrb[0].mxu0 %v517
      %v662 = vpop.f32.mrb[0].mxu0
      %v663 = vadd.f32 %v544, %v662
      %v664 = vpop.f32.mrb[0].mxu0
      %665 = vmatprep.mubr.f32.mxu0 0.0
      %666 = vmatmul.mubr.f32.gmra.mrb[0].mxu0 %v518
      %v667 = vpop.f32.mrb[0].mxu0
      %v668 = vadd.f32 %v544, %v667
      %v669 = vpop.f32.mrb[0].mxu0
      %670 = vmatprep.mubr.f32.mxu0 0.0
      %671 = vmatmul.mubr.f32.gmra.mrb[0].mxu0 %v519
      %v672 = vpop.f32.mrb[0].mxu0
      %v673 = vadd.f32 %v544, %v672
      %v674 = vpop.f32.mrb[0].mxu0
      %675 = vmatprep.mubr.f32.mxu0 0.0
      %676 = vmatmul.mubr.f32.gmra.mrb[0].mxu0 %v520
      %v677 = vpop.f32.mrb[0].mxu0
      %v678 = vadd.f32 %v544, %v677
      %v679 = vpop.f32.mrb[0].mxu0
      %680 = vmatprep.mubr.f32.mxu0 0.0
      %681 = vmatmul.mubr.f32.gmra.mrb[0].mxu0 %v521
      %v682 = vpop.f32.mrb[0].mxu0
      %v683 = vadd.f32 %v544, %v682
      %v684 = vpop.f32.mrb[0].mxu0
      %685 = vmatprep.mubr.f32.mxu0 0.0
      %686 = vmatmul.mubr.f32.gmra.mrb[0].mxu0 %v522
      %v687 = vpop.f32.mrb[0].mxu0
      %v688 = vadd.f32 %v544, %v687
      %v689 = vpop.f32.mrb[0].mxu0
      %690 = vdwg.mxu0
      %v691 = vmax.f32 %v613, 0.0
      %v692 = vmax.f32 %v618, 0.0
      %v693 = vmax.f32 %v623, 0.0
      %v694 = vmax.f32 %v628, 0.0
      %v695 = vmax.f32 %v633, 0.0
      %v696 = vmax.f32 %v638, 0.0
      %v697 = vmax.f32 %v643, 0.0
      %v698 = vmax.f32 %v648, 0.0
      %v699 = vmax.f32 %v653, 0.0
      %v700 = vmax.f32 %v658, 0.0
      %v701 = vmax.f32 %v663, 0.0
      %v702 = vmax.f32 %v668, 0.0
      %v703 = vmax.f32 %v673, 0.0
      %v704 = vmax.f32 %v678, 0.0
      %v705 = vmax.f32 %v683, 0.0
      %v706 = vmax.f32 %v688, 0.0
      %v707 = vld [vmem:[%s5] sm:$0xff]
      %v708 = vld [vmem:[%s5 + $0x8] sm:$0xff]
      %v709 = vld [vmem:[%s5 + $0x10] sm:$0xff]
      %v710 = vld [vmem:[%s5 + $0x18] sm:$0xff]
      %v711 = vld [vmem:[%s5 + $0x20] sm:$0xff]
      %v712 = vld [vmem:[%s5 + $0x28] sm:$0xff]
      %v713 = vld [vmem:[%s5 + $0x30] sm:$0xff]
      %v714 = vld [vmem:[%s5 + $0x38] sm:$0xff]
      %v715 = vld [vmem:[%s5 + $0x40] sm:$0xff]
      %v716 = vld [vmem:[%s5 + $0x48] sm:$0xff]
      %v717 = vld [vmem:[%s5 + $0x50] sm:$0xff]
      %v718 = vld [vmem:[%s5 + $0x58] sm:$0xff]
      %v719 = vld [vmem:[%s6] sm:$0x1]
      %v721 = vlaneseq
      %v722 = vshrl.u32 %v721, 7
      %v723 = vsub.s32 0, %v722
      %v724 = vrot.slane %v719, %v723
      %vm726 = vcmask 785408
      %v728 = vsel %vm726, %v691, 0
      %v731 = vsel %vm726, %v692, 0
      %v734 = vsel %vm726, %v693, 0
      %v737 = vsel %vm726, %v694, 0
      %v740 = vsel %vm726, %v695, 0
      %v743 = vsel %vm726, %v696, 0
      %v746 = vsel %vm726, %v697, 0
      %v749 = vsel %vm726, %v698, 0
      %v752 = vsel %vm726, %v699, 0
      %v755 = vsel %vm726, %v700, 0
      %v758 = vsel %vm726, %v701, 0
      %v761 = vsel %vm726, %v702, 0
      %v764 = vsel %vm726, %v703, 0
      %v767 = vsel %vm726, %v704, 0
      %v770 = vsel %vm726, %v705, 0
      %v773 = vsel %vm726, %v706, 0
      %775 = vmatprep.subr.mxu0 0.0
      %776 = vmatpush1.msra.mxu0 %v707
      %777 = vmatprep.subr.mxu0 0.0
      %778 = vmatpush1.msra.mxu0 %v708
      %779 = vmatprep.subr.mxu0 0.0
      %780 = vmatpush1.msra.mxu0 %v709
      %781 = vmatprep.subr.mxu0 0.0
      %782 = vmatpush1.msra.mxu0 %v710
      %783 = vmatprep.subr.mxu0 0.0
      %784 = vmatpush1.msra.mxu0 %v711
      %785 = vmatprep.subr.mxu0 0.0
      %786 = vmatpush1.msra.mxu0 %v712
      %787 = vmatprep.subr.mxu0 0.0
      %788 = vmatpush1.msra.mxu0 %v713
      %789 = vmatprep.subr.mxu0 0.0
      %790 = vmatpush1.msra.mxu0 %v714
      %791 = vmatprep.subr.mxu0 0.0
      %792 = vmatpush1.msra.mxu0 %v715
      %793 = vmatprep.subr.mxu0 0.0
      %794 = vmatpush1.msra.mxu0 %v716
      %795 = vmatprep.subr.mxu0 0.0
      %796 = vmatpush1.msra.mxu0 %v717
      %797 = vmatprep.subr.mxu0 0.0
      %798 = vmatpush1.msra.mxu0 %v718
      %799 = vmatprep.subr.mxu0 0.0
      %800 = vmatpush1.msra.mxu0 0.0
      %801 = vmatprep.subr.mxu0 0.0
      %802 = vmatpush1.msra.mxu0 0.0
      %803 = vmatprep.subr.mxu0 0.0
      %804 = vmatpush1.msra.mxu0 0.0
      %805 = vmatprep.subr.mxu0 0.0
      %806 = vmatpush1.msra.mxu0 0.0
      %807 = vmatprep.subr.mxu0 0.0
      %808 = vmatpush1.msra.mxu0 0.0
      %809 = vmatprep.subr.mxu0 0.0
      %810 = vmatpush1.msra.mxu0 0.0
      %811 = vmatprep.subr.mxu0 0.0
      %812 = vmatpush1.msra.mxu0 0.0
      %813 = vmatprep.subr.mxu0 0.0
      %814 = vmatpush1.msra.mxu0 0.0
      %815 = vmatprep.subr.mxu0 0.0
      %816 = vmatpush1.msra.mxu0 0.0
      %817 = vmatprep.subr.mxu0 0.0
      %818 = vmatpush1.msra.mxu0 0.0
      %819 = vmatprep.subr.mxu0 0.0
      %820 = vmatpush1.msra.mxu0 0.0
      %821 = vmatprep.subr.mxu0 0.0
      %822 = vmatpush1.msra.mxu0 0.0
      %823 = vmatprep.subr.mxu0 0.0
      %824 = vmatpush1.msra.mxu0 0.0
      %825 = vmatprep.subr.mxu0 0.0
      %826 = vmatpush1.msra.mxu0 0.0
      %827 = vmatprep.subr.mxu0 0.0
      %828 = vmatpush1.msra.mxu0 0.0
      %829 = vmatprep.subr.mxu0 0.0
      %830 = vmatpush1.msra.mxu0 0.0
      %831 = vmatprep.subr.mxu0 0.0
      %832 = vmatpush1.msra.mxu0 0.0
      %833 = vmatprep.subr.mxu0 0.0
      %834 = vmatpush1.msra.mxu0 0.0
      %835 = vmatprep.subr.mxu0 0.0
      %836 = vmatpush1.msra.mxu0 0.0
      %837 = vmatprep.subr.mxu0 0.0
      %838 = vmatpush1.msra.mxu0 0.0
      %839 = vmatprep.mubr.f32.mxu0 0.0
      %840 = vmatmul.mubr.f32.gmra.mrb[0].mxu0 %v728
      %v841 = vpop.f32.mrb[0].mxu0
      %v842 = vadd.f32 %v724, %v841
      %v843 = vpop.f32.mrb[0].mxu0
      %844 = vmatprep.mubr.f32.mxu0 0.0
      %845 = vmatmul.mubr.f32.gmra.mrb[0].mxu0 %v731
      %v846 = vpop.f32.mrb[0].mxu0
      %v847 = vadd.f32 %v724, %v846
      %v848 = vpop.f32.mrb[0].mxu0
      %849 = vmatprep.mubr.f32.mxu0 0.0
      %850 = vmatmul.mubr.f32.gmra.mrb[0].mxu0 %v734
      %v851 = vpop.f32.mrb[0].mxu0
      %v852 = vadd.f32 %v724, %v851
      %v853 = vpop.f32.mrb[0].mxu0
      %854 = vmatprep.mubr.f32.mxu0 0.0
      %855 = vmatmul.mubr.f32.gmra.mrb[0].mxu0 %v737
      %v856 = vpop.f32.mrb[0].mxu0
      %v857 = vadd.f32 %v724, %v856
      %v858 = vpop.f32.mrb[0].mxu0
      %859 = vmatprep.mubr.f32.mxu0 0.0
      %860 = vmatmul.mubr.f32.gmra.mrb[0].mxu0 %v740
      %v861 = vpop.f32.mrb[0].mxu0
      %v862 = vadd.f32 %v724, %v861
      %v863 = vpop.f32.mrb[0].mxu0
      %864 = vmatprep.mubr.f32.mxu0 0.0
      %865 = vmatmul.mubr.f32.gmra.mrb[0].mxu0 %v743
      %v866 = vpop.f32.mrb[0].mxu0
      %v867 = vadd.f32 %v724, %v866
      %v868 = vpop.f32.mrb[0].mxu0
      %869 = vmatprep.mubr.f32.mxu0 0.0
      %870 = vmatmul.mubr.f32.gmra.mrb[0].mxu0 %v746
      %v871 = vpop.f32.mrb[0].mxu0
      %v872 = vadd.f32 %v724, %v871
      %v873 = vpop.f32.mrb[0].mxu0
      %874 = vmatprep.mubr.f32.mxu0 0.0
      %875 = vmatmul.mubr.f32.gmra.mrb[0].mxu0 %v749
      %v876 = vpop.f32.mrb[0].mxu0
      %v877 = vadd.f32 %v724, %v876
      %v878 = vpop.f32.mrb[0].mxu0
      %879 = vmatprep.mubr.f32.mxu0 0.0
      %880 = vmatmul.mubr.f32.gmra.mrb[0].mxu0 %v752
      %v881 = vpop.f32.mrb[0].mxu0
      %v882 = vadd.f32 %v724, %v881
      %v883 = vpop.f32.mrb[0].mxu0
      %884 = vmatprep.mubr.f32.mxu0 0.0
      %885 = vmatmul.mubr.f32.gmra.mrb[0].mxu0 %v755
      %v886 = vpop.f32.mrb[0].mxu0
      %v887 = vadd.f32 %v724, %v886
      %v888 = vpop.f32.mrb[0].mxu0
      %889 = vmatprep.mubr.f32.mxu0 0.0
      %890 = vmatmul.mubr.f32.gmra.mrb[0].mxu0 %v758
      %v891 = vpop.f32.mrb[0].mxu0
      %v892 = vadd.f32 %v724, %v891
      %v893 = vpop.f32.mrb[0].mxu0
      %894 = vmatprep.mubr.f32.mxu0 0.0
      %895 = vmatmul.mubr.f32.gmra.mrb[0].mxu0 %v761
      %v896 = vpop.f32.mrb[0].mxu0
      %v897 = vadd.f32 %v724, %v896
      %v898 = vpop.f32.mrb[0].mxu0
      %899 = vmatprep.mubr.f32.mxu0 0.0
      %900 = vmatmul.mubr.f32.gmra.mrb[0].mxu0 %v764
      %v901 = vpop.f32.mrb[0].mxu0
      %v902 = vadd.f32 %v724, %v901
      %v903 = vpop.f32.mrb[0].mxu0
      %904 = vmatprep.mubr.f32.mxu0 0.0
      %905 = vmatmul.mubr.f32.gmra.mrb[0].mxu0 %v767
      %v906 = vpop.f32.mrb[0].mxu0
      %v907 = vadd.f32 %v724, %v906
      %v908 = vpop.f32.mrb[0].mxu0
      %909 = vmatprep.mubr.f32.mxu0 0.0
      %910 = vmatmul.mubr.f32.gmra.mrb[0].mxu0 %v770
      %v911 = vpop.f32.mrb[0].mxu0
      %v912 = vadd.f32 %v724, %v911
      %v913 = vpop.f32.mrb[0].mxu0
      %914 = vmatprep.mubr.f32.mxu0 0.0
      %915 = vmatmul.mubr.f32.gmra.mrb[0].mxu0 %v773
      %v916 = vpop.f32.mrb[0].mxu0
      %v917 = vadd.f32 %v724, %v916
      %v918 = vpop.f32.mrb[0].mxu0
      %919 = vdwg.mxu0
      %vm920 = vcmask 130048
      %921 = vst.msk [vmem:[%s280] sm:$0xff] %vm920, %v842
      %922 = vst.msk [vmem:[%s280 + $0x8] sm:$0xff] %vm920, %v847
      %923 = vst.msk [vmem:[%s280 + $0x10] sm:$0xff] %vm920, %v852
      %924 = vst.msk [vmem:[%s280 + $0x18] sm:$0xff] %vm920, %v857
      %925 = vst.msk [vmem:[%s280 + $0x20] sm:$0xff] %vm920, %v862
      %926 = vst.msk [vmem:[%s280 + $0x28] sm:$0xff] %vm920, %v867
      %927 = vst.msk [vmem:[%s280 + $0x30] sm:$0xff] %vm920, %v872
      %928 = vst.msk [vmem:[%s280 + $0x38] sm:$0xff] %vm920, %v877
      %929 = vst.msk [vmem:[%s280 + $0x40] sm:$0xff] %vm920, %v882
      %930 = vst.msk [vmem:[%s280 + $0x48] sm:$0xff] %vm920, %v887
      %931 = vst.msk [vmem:[%s280 + $0x50] sm:$0xff] %vm920, %v892
      %932 = vst.msk [vmem:[%s280 + $0x58] sm:$0xff] %vm920, %v897
      %933 = vst.msk [vmem:[%s280 + $0x60] sm:$0xff] %vm920, %v902
      %934 = vst.msk [vmem:[%s280 + $0x68] sm:$0xff] %vm920, %v907
      %935 = vst.msk [vmem:[%s280 + $0x70] sm:$0xff] %vm920, %v912
      %936 = vst.msk [vmem:[%s280 + $0x78] sm:$0xff] %vm920, %v917
      %s937 = smul.u32 16, %s18
      %p938 = scmp.lt.s32.totalorder %s937, 31
      %s939 = scalar_select %p938, %s937, 31
      %s940 = smul.addr %s939, 8
      %s941 = scalar_lea.vmem %s7, %s940
      // Predicated region
      $region49: #{tpu_custom_call.1} parent=47 // pred_check
        %p942 = pneg %p188
      $region50: #{tpu_custom_call.1} parent=47 // pred_check_branch
        %944 = sbr.rel (%p942) target = $region52
      $region51: #{tpu_custom_call.1} parent=47 // pred_region
        %s945 = smul.u32 16, %s18
      $region52: #{tpu_custom_call.1} parent=47 // pred_fallthru
        _
    $region48: #{tpu_custom_call.1} parent=5 // pred_fallthru
      _
    %p946 = scmp.le.s32.totalorder 2, %s13
    // Predicated region
    $region53: #{tpu_custom_call.1} parent=5 // pred_check
      %p947 = pneg %p946
    $region54: #{tpu_custom_call.1} parent=5 // pred_check_branch
      %949 = sbr.rel (%p947) target = $region56
    $region55: #{tpu_custom_call.1} parent=5 // pred_region
      %s950 = ssub.s32 %s13, 2
      // Predicated region
      $region57: #{tpu_custom_call.1} parent=55 // pred_check
        %p951 = pneg %p194
      $region58: #{tpu_custom_call.1} parent=55 // pred_check_branch
        %953 = sbr.rel (%p951) target = $region60
      $region59: #{tpu_custom_call.1} parent=55 // pred_region
        %s954 = smul.u32 16, %s19
        %p955 = scmp.lt.s32.totalorder %s954, 31
        %s956 = scalar_select %p955, %s954, 31
        %s957 = smul.addr %s956, 8
        %s958 = scalar_lea.vmem %s7, %s957
      $region60: #{tpu_custom_call.1} parent=55 // pred_fallthru
        _
    $region56: #{tpu_custom_call.1} parent=5 // pred_fallthru
      _
  $region6: #{tpu_custom_call.1} parent=0 // loop_footer
    %s17 = sadd.s32 1, %s13
  $region7: #{tpu_custom_call.1} parent=0 // loop_footer_branch
    %12 = sbr.rel target = $region3
  $region8: #{tpu_custom_call.1} parent=0 // loop_exit
    _

</llo_original>
